<compile_context>
chip_gen: v5e
topology: v5e:2x2
jax: 0.10.0
libtpu: 0.0.40
codegen_flags: <defaults>
</compile_context>

<pallas_src>
import functools

import jax
import jax.numpy as jnp
from jax.experimental import pallas as pl
from jax.experimental.pallas import tpu as pltpu


def _round_up(x, m):
    return ((x + m - 1) // m) * m


def _choose_tiling(B, block_rows, min_blocks=4, min_rows=512):
    """Pick a batch tile: multiple of 8, >= min_rows (unless batch is tiny),
    aiming for >= min_blocks grid steps and an even step count (v7x 2-TC)."""
    bt = _round_up(pl.cdiv(B, min_blocks), 8)
    bt = max(bt, min(min_rows, _round_up(B, 8)))   # don't shrink below ~512 rows
    bt = min(bt, _round_up(block_rows, 8))
    bt = max(bt, 8)
    n_blocks = pl.cdiv(B, bt)
    if n_blocks > 1 and n_blocks % 2:
        # Make the step count even so the "parallel" axis splits evenly across
        # two TensorCores; re-derive bt so the extra padding stays small.
        n_blocks += 1
        bt = max(8, _round_up(pl.cdiv(B, n_blocks), 8))
        n_blocks = pl.cdiv(B, bt)
        if n_blocks % 2:
            n_blocks += 1               # pad one (cheap) extra block instead
    return bt, n_blocks


def _vmem_limit_bytes():
    """Per-generation scoped-VMEM limit with headroom (64 MiB on v7x, 128 MiB
    on v5e/v6e); conservative fallback if the query is unavailable."""
    try:
        cap = int(pltpu.get_tpu_info().vmem_capacity_bytes)
    except Exception:
        cap = 64 << 20
    return min(cap - (16 << 20), 96 << 20)


def _ncf_mlp_kernel(x_ref, w1_ref, w2_ref, w3_ref, small_ref, out_ref):
    """One batch tile of the MLP: 128 -> 128 -> 64 -> 32 -> 1, sigmoid * 5.

    small_ref is a (5, 128) f32 slab: rows = [b1, b2|0, b3|0, w4^T|0, b4|0].
    """
    cd = w1_ref.dtype   # compute dtype (bf16 default, f32 for exact path)

    # Layer 1 (MXU): single K=128 dot on the lane-dense concatenated features.
    h = jnp.dot(x_ref[...], w1_ref[...], preferred_element_type=jnp.float32)
    h = jnp.maximum(h.astype(cd) + small_ref[0:1, :128].astype(cd), 0.0)

    # Layer 2 (MXU): (Bt, 128) -> (Bt, 64)
    h = jnp.dot(h, w2_ref[...], preferred_element_type=jnp.float32)
    h = jnp.maximum(h.astype(cd) + small_ref[1:2, :64].astype(cd), 0.0)

    # Layer 3 (MXU): (Bt, 64) -> (Bt, 32)
    h = jnp.dot(h, w3_ref[...], preferred_element_type=jnp.float32)
    h = jnp.maximum(h.astype(cd) + small_ref[2:3, :32].astype(cd), 0.0)

    # Layer 4: N=1 output -> VPU multiply + lane reduction (f32) instead of a
    # wasted MXU pass with a (32, 1) RHS.
    w4t = small_ref[3:4, :32]            # (1, 32) f32
    b4 = small_ref[4:5, 0:1]             # (1, 1)  f32
    logit = jnp.sum(h.astype(jnp.float32) * w4t, axis=-1, keepdims=True) + b4

    out_ref[...] = (jax.nn.sigmoid(logit) * 5.0).astype(out_ref.dtype)


def ncf_mlp_forward(params, user_idx, item_idx, *,
                    compute_dtype=jnp.bfloat16, block_rows=8192):
    """Full NCF_MLP forward: embedding gather in JAX glue, fused MLP in Pallas."""
    emb_dim = params["user_emb"].shape[1]
    in_dim = 2 * emb_dim
    assert (in_dim == 128 and params["w1"].shape == (128, 128)
            and params["w2"].shape == (128, 64) and params["w3"].shape == (64, 32)
            and params["w4"].shape == (32, 1)), (
        "kernel is specialized for the default 128->128->64->32->1 architecture")

    B = int(user_idx.shape[0])
    bt, n_blocks = _choose_tiling(B, block_rows)
    b_pad = n_blocks * bt

    # Embedding gather + concat + cast: fuses into one XLA output fusion, so
    # HBM bytes match two 64-wide streams while the kernel gets a single
    # lane-dense (B, 128) feature stream.
    # TODO(synk): for very large batches, pull the gather into the kernel via
    # PrefetchScalarGridSpec + per-tile DMA gather if profiles show it dominating.
    feats = jnp.concatenate(
        [jnp.take(params["user_emb"], user_idx, axis=0),
         jnp.take(params["item_emb"], item_idx, axis=0)],
        axis=-1).astype(compute_dtype)
    if b_pad != B:
        feats = jnp.pad(feats, ((0, b_pad - B), (0, 0)))   # zero rows, sliced off

    w1 = params["w1"].astype(compute_dtype)   # (128, 128)
    w2 = params["w2"].astype(compute_dtype)   # (128, 64)
    w3 = params["w3"].astype(compute_dtype)   # (64, 32)

    def _row(x):   # (1, d) f32, lane-padded to 128
        x = jnp.asarray(x, jnp.float32).reshape(1, -1)
        return jnp.pad(x, ((0, 0), (0, 128 - x.shape[1])))

    small = jnp.concatenate(
        [_row(params["b1"]), _row(params["b2"]), _row(params["b3"]),
         _row(params["w4"].T), _row(params["b4"])], axis=0)   # (5, 128) f32

    def _resident(x):
        # Full-array block + constant index map: DMA'd once, VMEM-resident.
        return pl.BlockSpec(x.shape, lambda i: (0, 0))

    out = pl.pallas_call(
        _ncf_mlp_kernel,
        out_shape=jax.ShapeDtypeStruct((b_pad, 1), jnp.float32),
        grid=(n_blocks,),
        in_specs=[
            pl.BlockSpec((bt, in_dim), lambda i: (i, 0)),   # streamed feature tiles
            _resident(w1), _resident(w2), _resident(w3), _resident(small),
        ],
        out_specs=pl.BlockSpec((bt, 1), lambda i: (i, 0)),
        compiler_params=pltpu.CompilerParams(
            dimension_semantics=("parallel",),   # megacore / v7x two-TC split
            vmem_limit_bytes=_vmem_limit_bytes(),
        ),
    )(feats, w1, w2, w3, small)

    # torch .squeeze(): (B, 1) -> (B,); drop padded rows.
    return out[:B, 0]


def init_params(key, n_users, n_items, emb_dim=64, hidden_layers=(128, 64, 32)):
    """Deterministic parameter init mirroring the PyTorch module's shapes."""
    keys = jax.random.split(key, 2 + 2 * (len(hidden_layers) + 1))
    params = {
        "user_emb": jax.random.normal(keys[0], (n_users, emb_dim), jnp.float32),
        "item_emb": jax.random.normal(keys[1], (n_items, emb_dim), jnp.float32),
    }
    dims = [emb_dim * 2] + list(hidden_layers) + [1]
    k = 2
    for li, (din, dout) in enumerate(zip(dims[:-1], dims[1:]), start=1):
        bound = 1.0 / (din ** 0.5)
        params[f"w{li}"] = jax.random.uniform(
            keys[k], (din, dout), jnp.float32, minval=-bound, maxval=bound)
        params[f"b{li}"] = jax.random.uniform(
            keys[k + 1], (1, dout), jnp.float32, minval=-bound, maxval=bound)
        k += 2
    return params


def reference_forward(params, user_idx, item_idx):
    """Pure-JAX f32 reference (mirrors the PyTorch module exactly)."""
    u = jnp.take(params["user_emb"], user_idx, axis=0)
    i = jnp.take(params["item_emb"], item_idx, axis=0)
    h = jnp.concatenate([u, i], axis=-1)
    for li in range(1, 4):
        h = jnp.maximum(h @ params[f"w{li}"] + params[f"b{li}"], 0.0)
    logit = h @ params["w4"] + params["b4"]
    return (jax.nn.sigmoid(logit) * 5.0).reshape(-1)


if __name__ == "__main__":
    n_users, n_items, emb_dim = 100, 200, 64
    batch = 19   # not a multiple of 8: exercises padding + slicing

    key = jax.random.PRNGKey(0)
    pkey, ukey, ikey = jax.random.split(key, 3)
    params = init_params(pkey, n_users, n_items, emb_dim)

    user_idx = jax.random.randint(ukey, (batch,), 0, n_users, dtype=jnp.int32)
    item_idx = jax.random.randint(ikey, (batch,), 0, n_items, dtype=jnp.int32)

    ref = reference_forward(params, user_idx, item_idx)

    # f32 path with a tiny tile -> exercises the multi-step (even) grid + padding.
    fwd_f32 = jax.jit(functools.partial(
        ncf_mlp_forward, params, compute_dtype=jnp.float32, block_rows=8))
    out_f32 = jax.block_until_ready(fwd_f32(user_idx, item_idx))
    assert out_f32.shape == (batch,), out_f32.shape
    assert jnp.allclose(out_f32, ref, atol=1e-5, rtol=1e-5), (out_f32, ref)

    # Default bf16 feature/weight/activation path (half HBM + VMEM traffic).
    fwd_bf16 = jax.jit(functools.partial(ncf_mlp_forward, params))
    out_bf16 = jax.block_until_ready(fwd_bf16(user_idx, item_idx))
    assert out_bf16.shape == (batch,), out_bf16.shape
    assert jnp.allclose(out_bf16, ref, atol=5e-2, rtol=5e-2), (out_bf16, ref)

    print("KERNEL_OK")
</pallas_src>

<mosaic_0001>
module attributes {stable_mosaic.version = 11 : i64} {
  func.func @_ncf_mlp_kernel(%arg0: i32, %arg1: memref<8x128xf32, #tpu.memory_space<vmem>>, %arg2: memref<128x128xf32, #tpu.memory_space<vmem>>, %arg3: memref<128x64xf32, #tpu.memory_space<vmem>>, %arg4: memref<64x32xf32, #tpu.memory_space<vmem>>, %arg5: memref<5x128xf32, #tpu.memory_space<vmem>>, %arg6: memref<8x1xf32, #tpu.memory_space<vmem>>) attributes {dimension_semantics = [#tpu.dimension_semantics<parallel>], iteration_bounds = array<i64: 4>, scalar_prefetch = 0 : i64, scratch_operands = 0 : i64, tpu.core_type = #tpu.core_type<tc>, window_params = [{transform_indices = @transform_0, window_bounds = array<i64: 8, 128>}, {pipeline_mode = #tpu.pipeline_mode<synchronous>, transform_indices = @transform_1, window_bounds = array<i64: 128, 128>}, {pipeline_mode = #tpu.pipeline_mode<synchronous>, transform_indices = @transform_2, window_bounds = array<i64: 128, 64>}, {pipeline_mode = #tpu.pipeline_mode<synchronous>, transform_indices = @transform_3, window_bounds = array<i64: 64, 32>}, {pipeline_mode = #tpu.pipeline_mode<synchronous>, transform_indices = @transform_4, window_bounds = array<i64: 5, 128>}, {transform_indices = @transform_5, window_bounds = array<i64: 8, 1>}]} {
    %c0 = arith.constant 0 : index
    %c0_0 = arith.constant 0 : index
    %0 = vector.load %arg1[%c0, %c0_0] : memref<8x128xf32, #tpu.memory_space<vmem>>, vector<8x128xf32>
    %c0_1 = arith.constant 0 : index
    %c0_2 = arith.constant 0 : index
    %1 = vector.load %arg2[%c0_1, %c0_2] : memref<128x128xf32, #tpu.memory_space<vmem>>, vector<128x128xf32>
    %cst = arith.constant dense<0.000000e+00> : vector<8x128xf32>
    %2 = tpu.matmul %0, %1, %cst {dimension_numbers = #tpu.dot_dimension_numbers<[1], [0], [0], [1], [0, 0, 1, 1], [], []>} : vector<8x128xf32>, vector<128x128xf32>, vector<8x128xf32> -> vector<8x128xf32>
    %c0_3 = arith.constant 0 : index
    %c0_4 = arith.constant 0 : index
    %3 = vector.load %arg5[%c0_3, %c0_4] : memref<5x128xf32, #tpu.memory_space<vmem>>, vector<1x128xf32>
    %4 = vector.broadcast %3 : vector<1x128xf32> to vector<8x128xf32>
    %5 = arith.addf %2, %4 : vector<8x128xf32>
    %cst_5 = arith.constant 0.000000e+00 : f32
    %6 = vector.broadcast %cst_5 : f32 to vector<8x128xf32>
    %7 = arith.maximumf %5, %6 : vector<8x128xf32>
    %c0_6 = arith.constant 0 : index
    %c0_7 = arith.constant 0 : index
    %8 = vector.load %arg3[%c0_6, %c0_7] : memref<128x64xf32, #tpu.memory_space<vmem>>, vector<128x64xf32>
    %cst_8 = arith.constant dense<0.000000e+00> : vector<8x64xf32>
    %9 = tpu.matmul %7, %8, %cst_8 {dimension_numbers = #tpu.dot_dimension_numbers<[1], [0], [0], [1], [0, 0, 1, 1], [], []>} : vector<8x128xf32>, vector<128x64xf32>, vector<8x64xf32> -> vector<8x64xf32>
    %c1 = arith.constant 1 : index
    %c0_9 = arith.constant 0 : index
    %10 = vector.load %arg5[%c1, %c0_9] : memref<5x128xf32, #tpu.memory_space<vmem>>, vector<1x64xf32>
    %11 = vector.broadcast %10 : vector<1x64xf32> to vector<8x64xf32>
    %12 = arith.addf %9, %11 : vector<8x64xf32>
    %cst_10 = arith.constant 0.000000e+00 : f32
    %13 = vector.broadcast %cst_10 : f32 to vector<8x64xf32>
    %14 = arith.maximumf %12, %13 : vector<8x64xf32>
    %c0_11 = arith.constant 0 : index
    %c0_12 = arith.constant 0 : index
    %15 = vector.load %arg4[%c0_11, %c0_12] : memref<64x32xf32, #tpu.memory_space<vmem>>, vector<64x32xf32>
    %cst_13 = arith.constant dense<0.000000e+00> : vector<8x32xf32>
    %16 = tpu.matmul %14, %15, %cst_13 {dimension_numbers = #tpu.dot_dimension_numbers<[1], [0], [0], [1], [0, 0, 1, 1], [], []>} : vector<8x64xf32>, vector<64x32xf32>, vector<8x32xf32> -> vector<8x32xf32>
    %c2 = arith.constant 2 : index
    %c0_14 = arith.constant 0 : index
    %17 = vector.load %arg5[%c2, %c0_14] : memref<5x128xf32, #tpu.memory_space<vmem>>, vector<1x32xf32>
    %18 = vector.broadcast %17 : vector<1x32xf32> to vector<8x32xf32>
    %19 = arith.addf %16, %18 : vector<8x32xf32>
    %cst_15 = arith.constant 0.000000e+00 : f32
    %20 = vector.broadcast %cst_15 : f32 to vector<8x32xf32>
    %21 = arith.maximumf %19, %20 : vector<8x32xf32>
    %c3 = arith.constant 3 : index
    %c0_16 = arith.constant 0 : index
    %22 = vector.load %arg5[%c3, %c0_16] : memref<5x128xf32, #tpu.memory_space<vmem>>, vector<1x32xf32>
    %c4 = arith.constant 4 : index
    %c0_17 = arith.constant 0 : index
    %23 = vector.load %arg5[%c4, %c0_17] : memref<5x128xf32, #tpu.memory_space<vmem>>, vector<1x1xf32>
    %24 = vector.broadcast %22 : vector<1x32xf32> to vector<8x32xf32>
    %25 = arith.mulf %21, %24 : vector<8x32xf32>
    %cst_18 = arith.constant dense<0.000000e+00> : vector<8xf32>
    %26 = vector.multi_reduction <add>, %25, %cst_18 [1] : vector<8x32xf32> to vector<8xf32>
    %27 = vector.shape_cast %26 : vector<8xf32> to vector<8x1xf32>
    %28 = vector.broadcast %23 : vector<1x1xf32> to vector<8x1xf32>
    %29 = arith.addf %27, %28 : vector<8x1xf32>
    %30 = arith.negf %29 : vector<8x1xf32>
    %31 = math.exp %30 : vector<8x1xf32>
    %cst_19 = arith.constant 1.000000e+00 : f32
    %32 = vector.broadcast %cst_19 : f32 to vector<8x1xf32>
    %33 = arith.addf %32, %31 : vector<8x1xf32>
    %34 = arith.divf %32, %33 : vector<8x1xf32>
    %cst_20 = arith.constant 5.000000e+00 : f32
    %35 = vector.broadcast %cst_20 : f32 to vector<8x1xf32>
    %36 = arith.mulf %34, %35 : vector<8x1xf32>
    %c0_21 = arith.constant 0 : index
    %c0_22 = arith.constant 0 : index
    %37 = vector.load %arg6[%c0_21, %c0_22] : memref<8x1xf32, #tpu.memory_space<vmem>>, vector<8x1xf32>
    tpu.vector_store %arg6[%c0_21, %c0_22], %36 {strides = array<i32>} : memref<8x1xf32, #tpu.memory_space<vmem>>, vector<8x1xf32>,
    return
  }
  func.func @transform_0(%arg0: i32) -> (i32, i32) {
    %c0_i32 = arith.constant 0 : i32
    %c0_i32_0 = arith.constant 0 : i32
    return %arg0, %c0_i32 : i32, i32
  }
  func.func @transform_1(%arg0: i32) -> (i32, i32) {
    %c0_i32 = arith.constant 0 : i32
    %c0_i32_0 = arith.constant 0 : i32
    %c0_i32_1 = arith.constant 0 : i32
    return %c0_i32, %c0_i32_0 : i32, i32
  }
  func.func @transform_2(%arg0: i32) -> (i32, i32) {
    %c0_i32 = arith.constant 0 : i32
    %c0_i32_0 = arith.constant 0 : i32
    %c0_i32_1 = arith.constant 0 : i32
    return %c0_i32, %c0_i32_0 : i32, i32
  }
  func.func @transform_3(%arg0: i32) -> (i32, i32) {
    %c0_i32 = arith.constant 0 : i32
    %c0_i32_0 = arith.constant 0 : i32
    %c0_i32_1 = arith.constant 0 : i32
    return %c0_i32, %c0_i32_0 : i32, i32
  }
  func.func @transform_4(%arg0: i32) -> (i32, i32) {
    %c0_i32 = arith.constant 0 : i32
    %c0_i32_0 = arith.constant 0 : i32
    %c0_i32_1 = arith.constant 0 : i32
    return %c0_i32, %c0_i32_0 : i32, i32
  }
  func.func @transform_5(%arg0: i32) -> (i32, i32) {
    %c0_i32 = arith.constant 0 : i32
    %c0_i32_0 = arith.constant 0 : i32
    return %arg0, %c0_i32 : i32, i32
  }
}

</mosaic_0001>

<llo_original>
// kernel: ncf_mlp_forward.1
$region0: #{ncf_mlp_forward.1}
  #allocation0 [shape = 'u32[]', space=smem, size = 0x4, offset = 0x4, fixed_abs, tag = 'smem constant byte address 0x4 - core index']
  #allocation1 [shape = 'u32[72,128]{1,0:T(1,128)}', space=vmem, size = 0x9000, scoped, tag = 'internal scratch']
  %s0 = inlined_call_operand.vmem [shape: f32[32,128], index: 0, kind: input, shape index: {}]
  %s1 = inlined_call_operand.vmem [shape: f32[128,128], index: 1, kind: input, shape index: {}]
  %s2 = inlined_call_operand.vmem [shape: f32[128,64], index: 2, kind: input, shape index: {}]
  %s3 = inlined_call_operand.vmem [shape: f32[64,32], index: 3, kind: input, shape index: {}]
  %s4 = inlined_call_operand.vmem [shape: f32[5,128], index: 4, kind: input, shape index: {}]
  %s5 = inlined_call_operand.vmem [shape: f32[32,1], index: 5, kind: output, shape index: {}]
  %s6 = sld [smem:[#allocation0]]
  $region53: #{ncf_mlp_forward.1} parent=0
    _
  %s8 = ssub.s32 1, %s6
  %s9 = scalar_select 0, %s8, %s6
  loop: start=0, step=1, limit=6
  $region2: #{ncf_mlp_forward.1} parent=0 // loop_pre_header
    _
  $region3: #{ncf_mlp_forward.1} parent=0 // loop_header
    %s11 = sphi 0, %s15
    %p12 = scmp.ge.s32.totalorder %s11, 6
    %s21 = sphi 0, %s23
    %s24 = sphi 0, %s21
    %s25 = sphi 0, %s24
    %s41 = sphi 0, %s25
    %s45 = sphi 0, %s45
    %s47 = sphi 0, %s45
    %s48 = sphi 0, %s47
    %s62 = sphi 0, %s48
    %s66 = sphi 0, %s66
    %s68 = sphi 0, %s66
    %s69 = sphi 0, %s68
    %s83 = sphi 0, %s69
    %s87 = sphi 0, %s87
    %s89 = sphi 0, %s87
    %s90 = sphi 0, %s89
    %s104 = sphi 0, %s90
    %s108 = sphi 0, %s108
    %s110 = sphi 0, %s108
    %s111 = sphi 0, %s110
    %s125 = sphi 0, %s111
    %s131 = sphi 0, %s133
    %s134 = sphi 0, %s131
    %s135 = sphi 0, %s134
    %s151 = sphi 0, %s135
  $region4: #{ncf_mlp_forward.1} parent=0 // loop_header_branch
    %14 = sbr.rel (%p12) target = $region8
  $region5: #{ncf_mlp_forward.1} parent=0 // loop_body
    %s16 = ssub.s32 %s11, 1
    %s17 = ssub.s32 %s11, 2
    %s18 = sadd.s32 %s11, 1
    %s19 = ssub.s32 %s11, %s18
    %p20 = scmp.eq.s32.totalorder %s19, 0
    %s22 = sadd.s32 %s21, 1
    %s23 = scalar_select %p20, %s21, %s22
    %p26 = pneg %p20
    %p27 = scmp.eq.s32.totalorder %s11, 3
    %p28 = por %p26, %p27
    %p29 = scmp.ne.s32.totalorder %s21, %s24
    %p30 = scmp.eq.s32.totalorder %s11, 0
    %p31 = por %p29, %p30
    %p32 = scmp.ne.s32.totalorder %s21, %s24
    %p33 = scmp.eq.s32.totalorder %s16, 3
    %p34 = por %p32, %p33
    %p35 = scmp.ne.s32.totalorder %s24, %s25
    %p36 = scmp.eq.s32.totalorder %s16, 0
    %p37 = por %p35, %p36
    %p38 = scmp.ne.s32.totalorder %s24, %s25
    %p39 = scmp.eq.s32.totalorder %s17, 3
    %p40 = por %p38, %p39
    %p42 = scmp.ne.s32.totalorder %s25, %s41
    %p43 = scmp.eq.s32.totalorder %s17, 0
    %p44 = por %p42, %p43
    %s46 = sadd.s32 %s45, 1
    %p49 = scmp.eq.s32.totalorder %s11, 3
    %p50 = scmp.ne.s32.totalorder %s45, %s47
    %p51 = scmp.eq.s32.totalorder %s11, 0
    %p52 = por %p50, %p51
    %p53 = scmp.ne.s32.totalorder %s45, %s47
    %p54 = scmp.eq.s32.totalorder %s16, 3
    %p55 = por %p53, %p54
    %p56 = scmp.ne.s32.totalorder %s47, %s48
    %p57 = scmp.eq.s32.totalorder %s16, 0
    %p58 = por %p56, %p57
    %p59 = scmp.ne.s32.totalorder %s47, %s48
    %p60 = scmp.eq.s32.totalorder %s17, 3
    %p61 = por %p59, %p60
    %p63 = scmp.ne.s32.totalorder %s48, %s62
    %p64 = scmp.eq.s32.totalorder %s17, 0
    %p65 = por %p63, %p64
    %s67 = sadd.s32 %s66, 1
    %p70 = scmp.eq.s32.totalorder %s11, 3
    %p71 = scmp.ne.s32.totalorder %s66, %s68
    %p72 = scmp.eq.s32.totalorder %s11, 0
    %p73 = por %p71, %p72
    %p74 = scmp.ne.s32.totalorder %s66, %s68
    %p75 = scmp.eq.s32.totalorder %s16, 3
    %p76 = por %p74, %p75
    %p77 = scmp.ne.s32.totalorder %s68, %s69
    %p78 = scmp.eq.s32.totalorder %s16, 0
    %p79 = por %p77, %p78
    %p80 = scmp.ne.s32.totalorder %s68, %s69
    %p81 = scmp.eq.s32.totalorder %s17, 3
    %p82 = por %p80, %p81
    %p84 = scmp.ne.s32.totalorder %s69, %s83
    %p85 = scmp.eq.s32.totalorder %s17, 0
    %p86 = por %p84, %p85
    %s88 = sadd.s32 %s87, 1
    %p91 = scmp.eq.s32.totalorder %s11, 3
    %p92 = scmp.ne.s32.totalorder %s87, %s89
    %p93 = scmp.eq.s32.totalorder %s11, 0
    %p94 = por %p92, %p93
    %p95 = scmp.ne.s32.totalorder %s87, %s89
    %p96 = scmp.eq.s32.totalorder %s16, 3
    %p97 = por %p95, %p96
    %p98 = scmp.ne.s32.totalorder %s89, %s90
    %p99 = scmp.eq.s32.totalorder %s16, 0
    %p100 = por %p98, %p99
    %p101 = scmp.ne.s32.totalorder %s89, %s90
    %p102 = scmp.eq.s32.totalorder %s17, 3
    %p103 = por %p101, %p102
    %p105 = scmp.ne.s32.totalorder %s90, %s104
    %p106 = scmp.eq.s32.totalorder %s17, 0
    %p107 = por %p105, %p106
    %s109 = sadd.s32 %s108, 1
    %p112 = scmp.eq.s32.totalorder %s11, 3
    %p113 = scmp.ne.s32.totalorder %s108, %s110
    %p114 = scmp.eq.s32.totalorder %s11, 0
    %p115 = por %p113, %p114
    %p116 = scmp.ne.s32.totalorder %s108, %s110
    %p117 = scmp.eq.s32.totalorder %s16, 3
    %p118 = por %p116, %p117
    %p119 = scmp.ne.s32.totalorder %s110, %s111
    %p120 = scmp.eq.s32.totalorder %s16, 0
    %p121 = por %p119, %p120
    %p122 = scmp.ne.s32.totalorder %s110, %s111
    %p123 = scmp.eq.s32.totalorder %s17, 3
    %p124 = por %p122, %p123
    %p126 = scmp.ne.s32.totalorder %s111, %s125
    %p127 = scmp.eq.s32.totalorder %s17, 0
    %p128 = por %p126, %p127
    %s129 = ssub.s32 %s11, %s18
    %p130 = scmp.eq.s32.totalorder %s129, 0
    %s132 = sadd.s32 %s131, 1
    %s133 = scalar_select %p130, %s131, %s132
    %p136 = pneg %p130
    %p137 = scmp.eq.s32.totalorder %s11, 3
    %p138 = por %p136, %p137
    %p139 = scmp.ne.s32.totalorder %s131, %s134
    %p140 = scmp.eq.s32.totalorder %s11, 0
    %p141 = por %p139, %p140
    %p142 = scmp.ne.s32.totalorder %s131, %s134
    %p143 = scmp.eq.s32.totalorder %s16, 3
    %p144 = por %p142, %p143
    %p145 = scmp.ne.s32.totalorder %s134, %s135
    %p146 = scmp.eq.s32.totalorder %s16, 0
    %p147 = por %p145, %p146
    %p148 = scmp.ne.s32.totalorder %s134, %s135
    %p149 = scmp.eq.s32.totalorder %s17, 3
    %p150 = por %p148, %p149
    %p152 = scmp.ne.s32.totalorder %s135, %s151
    %p153 = scmp.eq.s32.totalorder %s17, 0
    %p154 = por %p152, %p153
    %p155 = scmp.le.s32.totalorder 1, %s11
    %p156 = scmp.lt.s32.totalorder %s11, 5
    %p157 = pnand %p155, %p156
    %p158 = pneg %p157
    // Predicated region
    $region9: #{ncf_mlp_forward.1} parent=5 // pred_check
      _
    $region10: #{ncf_mlp_forward.1} parent=5 // pred_check_branch
      %160 = sbr.rel (%p157) target = $region12
    $region11: #{ncf_mlp_forward.1} parent=5 // pred_region
      %s161 = ssub.s32 %s11, 1
      // Predicated region
      $region13: #{ncf_mlp_forward.1} parent=11 // pred_check
        %p162 = pneg %p58
      $region14: #{ncf_mlp_forward.1} parent=11 // pred_check_branch
        %164 = sbr.rel (%p162) target = $region16
      $region15: #{ncf_mlp_forward.1} parent=11 // pred_region
        _
      $region16: #{ncf_mlp_forward.1} parent=11 // pred_fallthru
        _
      // Predicated region
      $region17: #{ncf_mlp_forward.1} parent=11 // pred_check
        %p165 = pneg %p79
      $region18: #{ncf_mlp_forward.1} parent=11 // pred_check_branch
        %167 = sbr.rel (%p165) target = $region20
      $region19: #{ncf_mlp_forward.1} parent=11 // pred_region
        _
      $region20: #{ncf_mlp_forward.1} parent=11 // pred_fallthru
        _
      // Predicated region
      $region21: #{ncf_mlp_forward.1} parent=11 // pred_check
        %p168 = pneg %p100
      $region22: #{ncf_mlp_forward.1} parent=11 // pred_check_branch
        %170 = sbr.rel (%p168) target = $region24
      $region23: #{ncf_mlp_forward.1} parent=11 // pred_region
        _
      $region24: #{ncf_mlp_forward.1} parent=11 // pred_fallthru
        _
      // Predicated region
      $region25: #{ncf_mlp_forward.1} parent=11 // pred_check
        %p171 = pneg %p121
      $region26: #{ncf_mlp_forward.1} parent=11 // pred_check_branch
        %173 = sbr.rel (%p171) target = $region28
      $region27: #{ncf_mlp_forward.1} parent=11 // pred_region
        _
      $region28: #{ncf_mlp_forward.1} parent=11 // pred_fallthru
        _
    $region12: #{ncf_mlp_forward.1} parent=5 // pred_fallthru
      _
    %p174 = scmp.lt.s32.totalorder %s11, 4
    // Predicated region
    $region29: #{ncf_mlp_forward.1} parent=5 // pred_check
      %p175 = pneg %p174
    $region30: #{ncf_mlp_forward.1} parent=5 // pred_check_branch
      %177 = sbr.rel (%p175) target = $region32
    $region31: #{ncf_mlp_forward.1} parent=5 // pred_region
      // Predicated region
      $region33: #{ncf_mlp_forward.1} parent=31 // pred_check
        %p178 = pneg %p31
      $region34: #{ncf_mlp_forward.1} parent=31 // pred_check_branch
        %180 = sbr.rel (%p178) target = $region36
      $region35: #{ncf_mlp_forward.1} parent=31 // pred_region
        %p181 = scmp.lt.s32.totalorder %s11, 3
        %s182 = scalar_select %p181, %s11, 3
        %s183 = smul.addr %s182, 8
        %s184 = scalar_lea.vmem %s0, %s183
      $region36: #{ncf_mlp_forward.1} parent=31 // pred_fallthru
        _
    $region32: #{ncf_mlp_forward.1} parent=5 // pred_fallthru
      _
    %p185 = scmp.le.s32.totalorder 1, %s11
    %p186 = scmp.lt.s32.totalorder %s11, 5
    %p187 = pnand %p185, %p186
    %p188 = pneg %p187
    // Predicated region
    $region37: #{ncf_mlp_forward.1} parent=5 // pred_check
      _
    $region38: #{ncf_mlp_forward.1} parent=5 // pred_check_branch
      %190 = sbr.rel (%p187) target = $region40
    $region39: #{ncf_mlp_forward.1} parent=5 // pred_region
      %s191 = ssub.s32 %s11, 1
      %p192 = scmp.lt.s32.totalorder %s16, 3
      %s193 = scalar_select %p192, %s16, 3
      %s194 = smul.addr %s193, 8
      %s195 = scalar_lea.vmem %s0, %s194
      %p196 = pneg %p37
      %p197 = pneg %p34
      %p198 = pneg %p58
      %p199 = pneg %p55
      %p200 = pneg %p79
      %p201 = pneg %p76
      %p202 = pneg %p100
      %p203 = pneg %p97
      %p204 = pneg %p121
      %p205 = pneg %p118
      %p206 = pneg %p147
      %p207 = pneg %p144
      %p208 = scmp.lt.s32.totalorder %s16, 3
      %s209 = scalar_select %p208, %s16, 3
      %s210 = smul.addr %s209, 8
      %s211 = scalar_lea.vmem %s5, %s210
      %p212 = scmp.lt.s32.totalorder %s16, 3
      %s213 = scalar_select %p212, %s16, 3
      %s214 = smul.addr %s213, 8
      %s215 = scalar_lea.vmem %s0, %s214
      %p216 = scmp.lt.s32.totalorder %s16, 3
      %s217 = scalar_select %p216, %s16, 3
      %s218 = smul.addr %s217, 8
      %s219 = scalar_lea.vmem %s5, %s218
      %v220 = vld [vmem:[%s215] sm:$0xff]
      %v221 = vld [vmem:[%s1] sm:$0xff]
      %v222 = vld [vmem:[%s1 + $0x8] sm:$0xff]
      %v223 = vld [vmem:[%s1 + $0x10] sm:$0xff]
      %v224 = vld [vmem:[%s1 + $0x18] sm:$0xff]
      %v225 = vld [vmem:[%s1 + $0x20] sm:$0xff]
      %v226 = vld [vmem:[%s1 + $0x28] sm:$0xff]
      %v227 = vld [vmem:[%s1 + $0x30] sm:$0xff]
      %v228 = vld [vmem:[%s1 + $0x38] sm:$0xff]
      %v229 = vld [vmem:[%s1 + $0x40] sm:$0xff]
      %v230 = vld [vmem:[%s1 + $0x48] sm:$0xff]
      %v231 = vld [vmem:[%s1 + $0x50] sm:$0xff]
      %v232 = vld [vmem:[%s1 + $0x58] sm:$0xff]
      %v233 = vld [vmem:[%s1 + $0x60] sm:$0xff]
      %v234 = vld [vmem:[%s1 + $0x68] sm:$0xff]
      %v235 = vld [vmem:[%s1 + $0x70] sm:$0xff]
      %v236 = vld [vmem:[%s1 + $0x78] sm:$0xff]
      %v237 = vld [vmem:[%s4] sm:$0x1]
      %v238 = vperm.slane %v237, 0
      %239 = vmatpush.msra.mxu0 %v236
      %240 = vmatpush.msra.mxu0 %v235
      %241 = vmatpush.msra.mxu0 %v234
      %242 = vmatpush.msra.mxu0 %v233
      %243 = vmatpush.msra.mxu0 %v232
      %244 = vmatpush.msra.mxu0 %v231
      %245 = vmatpush.msra.mxu0 %v230
      %246 = vmatpush.msra.mxu0 %v229
      %247 = vmatpush.msra.mxu0 %v228
      %248 = vmatpush.msra.mxu0 %v227
      %249 = vmatpush.msra.mxu0 %v226
      %250 = vmatpush.msra.mxu0 %v225
      %251 = vmatpush.msra.mxu0 %v224
      %252 = vmatpush.msra.mxu0 %v223
      %253 = vmatpush.msra.mxu0 %v222
      %254 = vmatpush.msra.mxu0 %v221
      %255 = vmatmul.f32.gmra.mxu0 %v220
      %v256 = vpop.f32.mrf.mxu0
      %v257 = vadd.f32 %v238, %v256
      %258 = vdwg.mxu0
      %v259 = vmax.f32 %v257, 0.0
      %v260 = vld [vmem:[%s2] sm:$0xff]
      %v261 = vld [vmem:[%s2 + $0x8] sm:$0xff]
      %v262 = vld [vmem:[%s2 + $0x10] sm:$0xff]
      %v263 = vld [vmem:[%s2 + $0x18] sm:$0xff]
      %v264 = vld [vmem:[%s2 + $0x20] sm:$0xff]
      %v265 = vld [vmem:[%s2 + $0x28] sm:$0xff]
      %v266 = vld [vmem:[%s2 + $0x30] sm:$0xff]
      %v267 = vld [vmem:[%s2 + $0x38] sm:$0xff]
      %v268 = vld [vmem:[%s2 + $0x40] sm:$0xff]
      %v269 = vld [vmem:[%s2 + $0x48] sm:$0xff]
      %v270 = vld [vmem:[%s2 + $0x50] sm:$0xff]
      %v271 = vld [vmem:[%s2 + $0x58] sm:$0xff]
      %v272 = vld [vmem:[%s2 + $0x60] sm:$0xff]
      %v273 = vld [vmem:[%s2 + $0x68] sm:$0xff]
      %v274 = vld [vmem:[%s2 + $0x70] sm:$0xff]
      %v275 = vld [vmem:[%s2 + $0x78] sm:$0xff]
      %v276 = vld [vmem:[%s4 + $0x1] sm:$0x1]
      %v277 = vperm.slane %v276, 0
      %278 = vmatpush.msra.mxu0 %v275
      %279 = vmatpush.msra.mxu0 %v274
      %280 = vmatpush.msra.mxu0 %v273
      %281 = vmatpush.msra.mxu0 %v272
      %282 = vmatpush.msra.mxu0 %v271
      %283 = vmatpush.msra.mxu0 %v270
      %284 = vmatpush.msra.mxu0 %v269
      %285 = vmatpush.msra.mxu0 %v268
      %286 = vmatpush.msra.mxu0 %v267
      %287 = vmatpush.msra.mxu0 %v266
      %288 = vmatpush.msra.mxu0 %v265
      %289 = vmatpush.msra.mxu0 %v264
      %290 = vmatpush.msra.mxu0 %v263
      %291 = vmatpush.msra.mxu0 %v262
      %292 = vmatpush.msra.mxu0 %v261
      %293 = vmatpush.msra.mxu0 %v260
      %294 = vmatmul.f32.gmra.mxu0 %v259
      %v295 = vpop.f32.mrf.mxu0
      %v296 = vadd.f32 %v277, %v295
      %297 = vdwg.mxu0
      %v298 = vmax.f32 %v296, 0.0
      %v299 = vld [vmem:[%s3] sm:$0xff]
      %v300 = vld [vmem:[%s3 + $0x8] sm:$0xff]
      %v301 = vld [vmem:[%s3 + $0x10] sm:$0xff]
      %v302 = vld [vmem:[%s3 + $0x18] sm:$0xff]
      %v303 = vld [vmem:[%s3 + $0x20] sm:$0xff]
      %v304 = vld [vmem:[%s3 + $0x28] sm:$0xff]
      %v305 = vld [vmem:[%s3 + $0x30] sm:$0xff]
      %v306 = vld [vmem:[%s3 + $0x38] sm:$0xff]
      %v307 = vld [vmem:[%s4 + $0x2] sm:$0x1]
      %v308 = vperm.slane %v307, 0
      %vm309 = vcmask 523264
      %v311 = vsel %vm309, %v298, 0
      %313 = vmatpush.msra.mxu0 0.0
      %314 = vmatpush.msra.mxu0 0.0
      %315 = vmatpush.msra.mxu0 0.0
      %316 = vmatpush.msra.mxu0 0.0
      %317 = vmatpush.msra.mxu0 0.0
      %318 = vmatpush.msra.mxu0 0.0
      %319 = vmatpush.msra.mxu0 0.0
      %320 = vmatpush.msra.mxu0 0.0
      %321 = vmatpush.msra.mxu0 %v306
      %322 = vmatpush.msra.mxu0 %v305
      %323 = vmatpush.msra.mxu0 %v304
      %324 = vmatpush.msra.mxu0 %v303
      %325 = vmatpush.msra.mxu0 %v302
      %326 = vmatpush.msra.mxu0 %v301
      %327 = vmatpush.msra.mxu0 %v300
      %328 = vmatpush.msra.mxu0 %v299
      %329 = vmatmul.f32.gmra.mxu0 %v311
      %v330 = vpop.f32.mrf.mxu0
      %v331 = vadd.f32 %v308, %v330
      %332 = vdwg.mxu0
      %v333 = vmax.f32 %v331, 0.0
      %v334 = vld [vmem:[%s4 + $0x3] sm:$0x1]
      %v335 = vld [vmem:[%s4 + $0x4] sm:$0x1]
      %v336 = vperm.slane %v334, 0
      %v337 = vmul.f32 %v333, %v336
      %vm338 = vcmask 261120
      %v339 = vsel %vm338, %v337, 0.0
      %340 = vadd.xlane.f32.xlu0 %v339
      %v341 = vpop.xlane.xlu0 %340
      %v342 = vperm.slane %v335, 0
      %v343 = vadd.f32 %v341, %v342
      %v344 = vxor.u32 %v343, 2147483648
      %v345 = vmul.f32 %v344, 1.442695
      %v346 = vpow.pop %v345
      %v347 = vadd.f32 %v346, 1.0
      %v348 = vrcp.pop %v347
      %v349 = vmul.f32 %v347, %v348
      %v350 = vsub.f32 1.0, %v349
      %v351 = vmul.f32 %v348, %v350
      %v352 = vadd.f32 %v348, %v351
      %vm353 = vweird.f32 %v347
      %vm354 = vweird.f32 %v348
      %vm355 = vmor %vm353, %vm354
      %v356 = vsel %vm355, %v348, %v352
      %v357 = vand.u32 2147483647, %v347
      %vm358 = vcmp.eq.f32.partialorder %v357, 8.507059e+37
      %v359 = vand.u32 %v347, 2147483648
      %v360 = vor.u32 1.1754944e-38, %v359
      %v361 = vsel %vm358, %v360, %v356
      %v362 = vmul.f32 1.0, %v361
      %v363 = vmul.f32 %v362, 5.0
      %vm364 = vcmask 7168
      %365 = vst.msk [vmem:[%s219] sm:$0xff] %vm364, %v363
      %p366 = scmp.lt.s32.totalorder %s16, 3
      %s367 = scalar_select %p366, %s16, 3
      %s368 = smul.addr %s367, 8
      %s369 = scalar_lea.vmem %s5, %s368
      // Predicated region
      $region41: #{ncf_mlp_forward.1} parent=39 // pred_check
        %p370 = pneg %p144
      $region42: #{ncf_mlp_forward.1} parent=39 // pred_check_branch
        %372 = sbr.rel (%p370) target = $region44
      $region43: #{ncf_mlp_forward.1} parent=39 // pred_region
        _
      $region44: #{ncf_mlp_forward.1} parent=39 // pred_fallthru
        _
    $region40: #{ncf_mlp_forward.1} parent=5 // pred_fallthru
      _
    %p373 = scmp.le.s32.totalorder 2, %s11
    // Predicated region
    $region45: #{ncf_mlp_forward.1} parent=5 // pred_check
      %p374 = pneg %p373
    $region46: #{ncf_mlp_forward.1} parent=5 // pred_check_branch
      %376 = sbr.rel (%p374) target = $region48
    $region47: #{ncf_mlp_forward.1} parent=5 // pred_region
      %s377 = ssub.s32 %s11, 2
      // Predicated region
      $region49: #{ncf_mlp_forward.1} parent=47 // pred_check
        %p378 = pneg %p150
      $region50: #{ncf_mlp_forward.1} parent=47 // pred_check_branch
        %380 = sbr.rel (%p378) target = $region52
      $region51: #{ncf_mlp_forward.1} parent=47 // pred_region
        %p381 = scmp.lt.s32.totalorder %s17, 3
        %s382 = scalar_select %p381, %s17, 3
        %s383 = smul.addr %s382, 8
        %s384 = scalar_lea.vmem %s5, %s383
      $region52: #{ncf_mlp_forward.1} parent=47 // pred_fallthru
        _
    $region48: #{ncf_mlp_forward.1} parent=5 // pred_fallthru
      _
  $region6: #{ncf_mlp_forward.1} parent=0 // loop_footer
    %s15 = sadd.s32 1, %s11
  $region7: #{ncf_mlp_forward.1} parent=0 // loop_footer_branch
    %10 = sbr.rel target = $region3
  $region8: #{ncf_mlp_forward.1} parent=0 // loop_exit
    _

</llo_original>
